<compile_context>
chip_gen: v5e
topology: v5e:2x2
jax: 0.10.0
libtpu: 0.0.40
codegen_flags: <defaults>
</compile_context>

<pallas_src>
import jax
import jax.numpy as jnp
from jax.experimental import pallas as pl
from jax.experimental.pallas import tpu as pltpu


# ---------------------------------------------------------------------------
# Hardware-aware configuration
# ---------------------------------------------------------------------------
def _hw_config():
    """Returns (n_cores, combined block-bytes target, vmem_limit, bf16_valu)."""
    kind = ""
    try:
        kind = jax.devices()[0].device_kind.lower()
    except Exception:
        pass
    is_v7 = ("v7" in kind) or ("7x" in kind)
    old_gen = any(t in kind for t in ("v2", "v3", "v4", "v5"))  # no bf16 VALU
    if is_v7:
        n_cores = 2                       # 2 TensorCores per chip
        block_bytes = 4 * 1024 * 1024     # combined (p+g) bytes per grid block
        vmem_limit = 32 * 1024 * 1024     # v7x: only 64 MiB physical VMEM/TC
    else:
        n_cores = 1                       # v5e / v6e: single TensorCore
        block_bytes = 8 * 1024 * 1024     # ~4 MiB per input per block
        vmem_limit = 64 * 1024 * 1024     # 128 MiB physical VMEM
    try:
        # Refine against the actual part if the query is available.
        phys = int(pltpu.get_tpu_info().vmem_capacity_bytes)
        vmem_limit = min(vmem_limit, max(16 * 1024 * 1024, phys // 2))
    except Exception:
        pass
    return n_cores, block_bytes, vmem_limit, (not old_gen)


def _pick_fold(R, S0, row_min, row_target):
    """Largest F | S0 with R*F <= row_target (zero-copy sublane fill)."""
    fmax = row_target // max(R, 1)
    if fmax <= 1 or S0 <= 1:
        return 1
    best = 1
    for f in range(fmax, 1, -1):
        if S0 % f == 0 and S0 // f >= 128:
            best = f
            break
    if R * best < row_min:                # relax lane-length requirement
        for f in range(fmax, best, -1):
            if S0 % f == 0 and S0 // f >= 8:
                best = f
                break
    return best


def _pick_row_blocks(rows, n_cores, bytes_in, block_bytes):
    """Number of row blocks: >=n_cores (megacore) and small enough for VMEM."""
    need = max(n_cores, -(-(rows * 128 * bytes_in) // block_bytes))
    if need <= 1:
        return 1
    for nrb in range(need, min(rows, 4096) + 1):
        if rows % nrb:
            continue
        if (rows // nrb) % 8 == 0:        # block row dim must be 8-aligned
            return nrb
    return 1                              # fall back: one block of all rows


# ---------------------------------------------------------------------------
# Kernel
# ---------------------------------------------------------------------------
def _make_dice_kernel(row_block, tile, s_valid, n_s_tiles, compute_dtype, ragged):
    def _round(x):
        if x.dtype == jnp.bfloat16:
            # Magic-constant round-half-to-even: exact for bf16 (|x|>=128 is
            # already integral in bf16), VALU adds/selects only.
            ax = jnp.abs(x)
            r = (ax + 128.0) - 128.0
            r = jnp.where(ax < 128.0, r, ax)
            return jnp.where(x < 0, -r, r)
        return jnp.round(x)

    def kernel(p_ref, g_ref, num_ref, den_ref):
        t = pl.program_id(1)

        @pl.when(t == 0)
        def _init():
            num_ref[...] = jnp.zeros_like(num_ref)
            den_ref[...] = jnp.zeros_like(den_ref)

        p = _round(p_ref[...].astype(compute_dtype))
        g = _round(g_ref[...].astype(compute_dtype))
        prod = p * g
        psum = p + g

        def _acc(pr, ps):
            # Upcast happens only at the lane reduction (f32 accumulation).
            num_ref[...] += jnp.sum(pr, axis=-1, keepdims=True, dtype=jnp.float32)
            den_ref[...] += jnp.sum(ps, axis=-1, keepdims=True, dtype=jnp.float32)

        if ragged:
            is_partial = t == (n_s_tiles - 1)

            @pl.when(jnp.logical_not(is_partial))
            def _full():
                _acc(prod, psum)

            @pl.when(is_partial)
            def _tail():
                # Mask lanes past the true length (no wrapper-side padding).
                lane = jax.lax.broadcasted_iota(jnp.int32, (row_block, tile), 1)
                valid = (t * tile + lane) < s_valid
                _acc(jnp.where(valid, prod, 0), jnp.where(valid, psum, 0))
        else:
            _acc(prod, psum)

    return kernel


# ---------------------------------------------------------------------------
# Wrapper
# ---------------------------------------------------------------------------
def dice_metric(p, g, *, n_dims=2, smooth=1.0, block_bytes=None):
    """Pallas implementation of Dice.forward (sum over dims 1..n_dims, mean)."""
    assert n_dims in (1, 2, 3)
    assert p.shape == g.shape
    assert p.ndim >= n_dims + 1

    n_cores, default_block_bytes, vmem_limit, bf16_valu = _hw_config()
    if block_bytes is None:
        block_bytes = default_block_bytes

    # Move the summed dims (1..n_dims) last, only when trailing kept dims exist.
    # TODO(synk): this standalone transpose is a full HBM copy for layouts with
    # trailing kept dims; fusing the relayout into the pallas operands would
    # remove it.  The common Dice layouts (no trailing kept dims) never hit it.
    if p.ndim > n_dims + 1:
        perm = (0,) + tuple(range(n_dims + 1, p.ndim)) + tuple(range(1, n_dims + 1))
        p = jnp.transpose(p, perm)
        g = jnp.transpose(g, perm)
    n_keep = p.ndim - n_dims

    R = 1
    for d in p.shape[:n_keep]:
        R *= int(d)
    S0 = 1
    for d in p.shape[n_keep:]:
        S0 *= int(d)

    bytes_in = p.dtype.itemsize + g.dtype.itemsize   # both inputs, per element

    both_bf16 = (p.dtype == jnp.bfloat16) and (g.dtype == jnp.bfloat16)
    compute_dtype = jnp.bfloat16 if (both_bf16 and bf16_valu) else jnp.float32
    row_min = 16 if compute_dtype == jnp.bfloat16 else 8

    # Zero-copy fold of S into the row axis (F divides S0 exactly -> free reshape).
    F = _pick_fold(R, S0, row_min, row_target=256)
    rows, S = R * F, S0 // F
    p2 = p.reshape(rows, S)
    g2 = g.reshape(rows, S)

    # Block selection: target ~block_bytes of combined input data per grid step.
    block_elems = max(128, block_bytes // bytes_in)
    nrb = _pick_row_blocks(rows, n_cores, bytes_in, block_bytes)
    row_block = rows // nrb

    if row_block * S <= block_elems or S <= 128:
        tile, n_s_tiles = S, 1
    else:
        tile = max(128, (min(block_elems // row_block, S) // 128) * 128)
        n_s_tiles = -(-S // tile)
    ragged = (n_s_tiles * tile) != S

    kernel = _make_dice_kernel(row_block, tile, S, n_s_tiles, compute_dtype, ragged)

    n_elems = rows * S
    cost = pl.CostEstimate(
        flops=6 * n_elems,
        transcendentals=0,
        bytes_accessed=n_elems * bytes_in + 2 * rows * 4,
    )

    num, den = pl.pallas_call(
        kernel,
        out_shape=(
            jax.ShapeDtypeStruct((rows, 1), jnp.float32),
            jax.ShapeDtypeStruct((rows, 1), jnp.float32),
        ),
        grid_spec=pltpu.PrefetchScalarGridSpec(
            num_scalar_prefetch=0,
            grid=(nrb, n_s_tiles),
            in_specs=[
                pl.BlockSpec((row_block, tile), lambda r, t: (r, t)),
                pl.BlockSpec((row_block, tile), lambda r, t: (r, t)),
            ],
            out_specs=[
                pl.BlockSpec((row_block, 1), lambda r, t: (r, 0)),
                pl.BlockSpec((row_block, 1), lambda r, t: (r, 0)),
            ],
        ),
        compiler_params=pltpu.CompilerParams(
            dimension_semantics=("parallel", "arbitrary"),
            vmem_limit_bytes=vmem_limit,
        ),
        cost_estimate=cost,
    )(p2, g2)

    # Combine the F folded sub-rows back into per-original-row sums.
    num = num.reshape(R, F).sum(axis=1)
    den = den.reshape(R, F).sum(axis=1)
    return jnp.mean((2.0 * num + smooth) / (den + smooth))


# ---------------------------------------------------------------------------
# Pure-JAX reference (mirrors the PyTorch Dice.forward)
# ---------------------------------------------------------------------------
def _reference_dice(p, g, *, n_dims, smooth=1.0):
    sum_dims = tuple(range(1, n_dims + 1))
    pr = jnp.round(p.astype(jnp.float32))
    gr = jnp.round(g.astype(jnp.float32))
    num = jnp.sum(pr * gr, axis=sum_dims)
    den = jnp.sum(pr + gr, axis=sum_dims)
    return jnp.mean((2.0 * num + smooth) / (den + smooth))


if __name__ == "__main__":
    key = jax.random.PRNGKey(0)
    ks = jax.random.split(key, 12)
    smooth = 1.0

    def _check(out, ref):
        assert jnp.allclose(out, ref, rtol=1e-6, atol=1e-6), (out, ref)

    # Test 1: nDims=3, (2, 4, 16, 16) f32/f32 -> single-block path.
    s1 = (2, 4, 16, 16)
    p1 = jax.nn.sigmoid(jax.random.normal(ks[0], s1, dtype=jnp.float32))
    g1 = jax.random.bernoulli(ks[1], 0.4, s1).astype(jnp.float32)
    out1 = jax.block_until_ready(dice_metric(p1, g1, n_dims=3, smooth=smooth))
    _check(out1, _reference_dice(p1, g1, n_dims=3, smooth=smooth))

    # Test 2: nDims=2, ragged spatial size, mixed dtypes (f32 p, bf16 g).
    s2 = (2, 50, 333)
    p2 = jax.nn.sigmoid(jax.random.normal(ks[2], s2, dtype=jnp.float32))
    g2 = jax.random.bernoulli(ks[3], 0.5, s2).astype(jnp.bfloat16)
    out2 = jax.block_until_ready(dice_metric(p2, g2, n_dims=2, smooth=smooth))
    _check(out2, _reference_dice(p2, g2, n_dims=2, smooth=smooth))

    # Test 3: nDims=2 with a trailing (kept) dim -> transpose path.
    s3 = (2, 16, 16, 3)
    p3 = jax.nn.sigmoid(jax.random.normal(ks[4], s3, dtype=jnp.float32))
    g3 = jax.random.bernoulli(ks[5], 0.3, s3).astype(jnp.float32)
    out3 = jax.block_until_ready(dice_metric(p3, g3, n_dims=2, smooth=smooth))
    _check(out3, _reference_dice(p3, g3, n_dims=2, smooth=smooth))

    # Test 4: small block budget -> multi-tile + in-kernel ragged-tail masking.
    s4 = (2, 8, 1000)
    p4 = jax.nn.sigmoid(jax.random.normal(ks[6], s4, dtype=jnp.float32))
    g4 = jax.random.bernoulli(ks[7], 0.6, s4).astype(jnp.float32)
    out4 = jax.block_until_ready(
        dice_metric(p4, g4, n_dims=2, smooth=smooth, block_bytes=64 * 1024))
    _check(out4, _reference_dice(p4, g4, n_dims=2, smooth=smooth))

    # Test 5: both inputs bf16 -> bf16-native compute path on v6e/v7x.
    s5 = (4, 32, 512)
    p5 = jax.nn.sigmoid(jax.random.normal(ks[8], s5, dtype=jnp.float32)).astype(jnp.bfloat16)
    g5 = jax.random.bernoulli(ks[9], 0.5, s5).astype(jnp.bfloat16)
    out5 = jax.block_until_ready(
        dice_metric(p5, g5, n_dims=2, smooth=smooth, block_bytes=128 * 1024))
    _check(out5, _reference_dice(p5, g5, n_dims=2, smooth=smooth))

    # Test 6: small block budget forcing a multi-row-block ('parallel') grid.
    s6 = (16, 64, 64)
    p6 = jax.nn.sigmoid(jax.random.normal(ks[10], s6, dtype=jnp.float32))
    g6 = jax.random.bernoulli(ks[11], 0.4, s6).astype(jnp.float32)
    out6 = jax.block_until_ready(
        dice_metric(p6, g6, n_dims=2, smooth=smooth, block_bytes=64 * 1024))
    _check(out6, _reference_dice(p6, g6, n_dims=2, smooth=smooth))

    print("KERNEL_OK")
</pallas_src>

<mosaic_0001>
module attributes {stable_mosaic.version = 11 : i64} {
  func.func @kernel(%arg0: i32, %arg1: i32, %arg2: memref<16x128xf32, #tpu.memory_space<vmem>>, %arg3: memref<16x128xf32, #tpu.memory_space<vmem>>, %arg4: memref<16x1xf32, #tpu.memory_space<vmem>>, %arg5: memref<16x1xf32, #tpu.memory_space<vmem>>) attributes {dimension_semantics = [#tpu.dimension_semantics<parallel>, #tpu.dimension_semantics<arbitrary>], iteration_bounds = array<i64: 1, 1>, scalar_prefetch = 0 : i64, scratch_operands = 0 : i64, tpu.core_type = #tpu.core_type<tc>, window_params = [{transform_indices = @transform_0, window_bounds = array<i64: 16, 128>}, {transform_indices = @transform_1, window_bounds = array<i64: 16, 128>}, {transform_indices = @transform_2, window_bounds = array<i64: 16, 1>}, {transform_indices = @transform_3, window_bounds = array<i64: 16, 1>}]} {
    %c0_i32 = arith.constant 0 : i32
    %0 = arith.cmpi eq, %arg1, %c0_i32 : i32
    %1 = arith.extui %0 : i1 to i32
    %c0_i32_0 = arith.constant 0 : i32
    %2 = arith.cmpi ne, %1, %c0_i32_0 : i32
    scf.if %2 {
      %cst_13 = arith.constant 0.000000e+00 : f32
      %19 = vector.broadcast %cst_13 : f32 to vector<16x1xf32>
      %c0_14 = arith.constant 0 : index
      %c0_15 = arith.constant 0 : index
      %20 = vector.load %arg4[%c0_14, %c0_15] : memref<16x1xf32, #tpu.memory_space<vmem>>, vector<16x1xf32>
      tpu.vector_store %arg4[%c0_14, %c0_15], %19 {strides = array<i32>} : memref<16x1xf32, #tpu.memory_space<vmem>>, vector<16x1xf32>,
      %cst_16 = arith.constant 0.000000e+00 : f32
      %21 = vector.broadcast %cst_16 : f32 to vector<16x1xf32>
      %c0_17 = arith.constant 0 : index
      %c0_18 = arith.constant 0 : index
      %22 = vector.load %arg5[%c0_17, %c0_18] : memref<16x1xf32, #tpu.memory_space<vmem>>, vector<16x1xf32>
      tpu.vector_store %arg5[%c0_17, %c0_18], %21 {strides = array<i32>} : memref<16x1xf32, #tpu.memory_space<vmem>>, vector<16x1xf32>,
    } else {
    }
    %c0 = arith.constant 0 : index
    %c0_1 = arith.constant 0 : index
    %3 = vector.load %arg2[%c0, %c0_1] : memref<16x128xf32, #tpu.memory_space<vmem>>, vector<16x128xf32>
    %4 = math.roundeven %3 : vector<16x128xf32>
    %c0_2 = arith.constant 0 : index
    %c0_3 = arith.constant 0 : index
    %5 = vector.load %arg3[%c0_2, %c0_3] : memref<16x128xf32, #tpu.memory_space<vmem>>, vector<16x128xf32>
    %6 = math.roundeven %5 : vector<16x128xf32>
    %7 = arith.mulf %4, %6 : vector<16x128xf32>
    %8 = arith.addf %4, %6 : vector<16x128xf32>
    %c0_4 = arith.constant 0 : index
    %c0_5 = arith.constant 0 : index
    %9 = vector.load %arg4[%c0_4, %c0_5] : memref<16x1xf32, #tpu.memory_space<vmem>>, vector<16x1xf32>
    %cst = arith.constant dense<0.000000e+00> : vector<16xf32>
    %10 = vector.multi_reduction <add>, %7, %cst [1] : vector<16x128xf32> to vector<16xf32>
    %11 = vector.shape_cast %10 : vector<16xf32> to vector<16x1xf32>
    %12 = arith.addf %9, %11 : vector<16x1xf32>
    %c0_6 = arith.constant 0 : index
    %c0_7 = arith.constant 0 : index
    %13 = vector.load %arg4[%c0_6, %c0_7] : memref<16x1xf32, #tpu.memory_space<vmem>>, vector<16x1xf32>
    tpu.vector_store %arg4[%c0_6, %c0_7], %12 {strides = array<i32>} : memref<16x1xf32, #tpu.memory_space<vmem>>, vector<16x1xf32>,
    %c0_8 = arith.constant 0 : index
    %c0_9 = arith.constant 0 : index
    %14 = vector.load %arg5[%c0_8, %c0_9] : memref<16x1xf32, #tpu.memory_space<vmem>>, vector<16x1xf32>
    %cst_10 = arith.constant dense<0.000000e+00> : vector<16xf32>
    %15 = vector.multi_reduction <add>, %8, %cst_10 [1] : vector<16x128xf32> to vector<16xf32>
    %16 = vector.shape_cast %15 : vector<16xf32> to vector<16x1xf32>
    %17 = arith.addf %14, %16 : vector<16x1xf32>
    %c0_11 = arith.constant 0 : index
    %c0_12 = arith.constant 0 : index
    %18 = vector.load %arg5[%c0_11, %c0_12] : memref<16x1xf32, #tpu.memory_space<vmem>>, vector<16x1xf32>
    tpu.vector_store %arg5[%c0_11, %c0_12], %17 {strides = array<i32>} : memref<16x1xf32, #tpu.memory_space<vmem>>, vector<16x1xf32>,
    return
  }
  func.func @transform_0(%arg0: i32, %arg1: i32) -> (i32, i32) {
    %c0_i32 = arith.constant 0 : i32
    return %arg0, %arg1 : i32, i32
  }
  func.func @transform_1(%arg0: i32, %arg1: i32) -> (i32, i32) {
    %c0_i32 = arith.constant 0 : i32
    return %arg0, %arg1 : i32, i32
  }
  func.func @transform_2(%arg0: i32, %arg1: i32) -> (i32, i32) {
    %c0_i32 = arith.constant 0 : i32
    %c0_i32_0 = arith.constant 0 : i32
    return %arg0, %c0_i32 : i32, i32
  }
  func.func @transform_3(%arg0: i32, %arg1: i32) -> (i32, i32) {
    %c0_i32 = arith.constant 0 : i32
    %c0_i32_0 = arith.constant 0 : i32
    return %arg0, %c0_i32 : i32, i32
  }
}

</mosaic_0001>

<llo_original>
// kernel: tpu_custom_call.1
$region0: #{tpu_custom_call.1}
  #allocation0 [shape = 'u32[]', space=smem, size = 0x4, offset = 0x4, fixed_abs, tag = 'smem constant byte address 0x4 - core index']
  #allocation1 [shape = 'u32[72,128]{1,0:T(1,128)}', space=vmem, size = 0x9000, scoped, tag = 'internal scratch']
  %s0 = inlined_call_operand.hbm [shape: f32[16,128], index: 0, kind: input, shape index: {}]
  %s1 = inlined_call_operand.hbm [shape: f32[16,128], index: 1, kind: input, shape index: {}]
  %s2 = inlined_call_operand.vmem [shape: f32[16,1], index: 2, kind: output, shape index: {0}]
  %s3 = inlined_call_operand.vmem [shape: f32[16,1], index: 3, kind: output, shape index: {1}]
  %4 = xla_tuple %s2, %s3
  %s5 = sld [smem:[#allocation0]]
  $region38: #{tpu_custom_call.1} parent=0
    _
  %s7 = ssub.s32 1, %s5
  %s8 = scalar_select 0, %s7, %s5
  $region1: #{tpu_custom_call.1} parent=0
    #allocation2 [shape = 'u8[8192]{0}', space=vmem, size = 0x2000, scoped, tag = 'input window, operand 0, single buffered']
    #allocation3 [shape = 's32[1]{0}', space=sflag, size = 0x4, scoped, tag = 'scoped memory for tpu_custom_call.1']
    #allocation4 [shape = 'u8[8192]{0}', space=vmem, size = 0x2000, scoped, tag = 'input window, operand 1, single buffered']
    #allocation5 [shape = 's32[1]{0}', space=sflag, size = 0x4, scoped, tag = 'scoped memory for tpu_custom_call.1']
    %9 = vsyncpa [#allocation3], 0
    %10 = vsyncpa [#allocation5], 0
    // Predicated region
    $region2: #{tpu_custom_call.1} parent=1 // pred_check
      _
    $region3: #{tpu_custom_call.1} parent=1 // pred_check_branch
      %12 = sbr.rel (0) target = $region5
    $region4: #{tpu_custom_call.1} parent=1 // pred_region
      %14 = vsyncadd [#allocation3], 0
      %s15 = sshll.u32 %s0, 4
      %s16 = int_to_ptr.hbm [resolvable:$true] %s15
      %s17 = sshll.u32 [#allocation2], 4
      %s18 = int_to_ptr.vmem [resolvable:$true] %s17
      %23 = dma.hbm_to_vmem [thread:$0]  %s16, 256, %s18, [#allocation3], 128, 128, 8
    $region5: #{tpu_custom_call.1} parent=1 // pred_fallthru
      _
    // Predicated region
    $region6: #{tpu_custom_call.1} parent=1 // pred_check
      _
    $region7: #{tpu_custom_call.1} parent=1 // pred_check_branch
      %25 = sbr.rel (0) target = $region9
    $region8: #{tpu_custom_call.1} parent=1 // pred_region
      %27 = vsyncadd [#allocation5], 0
      %s28 = sshll.u32 %s1, 4
      %s29 = int_to_ptr.hbm [resolvable:$true] %s28
      %s30 = sshll.u32 [#allocation4], 4
      %s31 = int_to_ptr.vmem [resolvable:$true] %s30
      %36 = dma.hbm_to_vmem [thread:$0]  %s29, 256, %s31, [#allocation5], 128, 128, 8
    $region9: #{tpu_custom_call.1} parent=1 // pred_fallthru
      _
    // Predicated region
    $region10: #{tpu_custom_call.1} parent=1 // pred_check
      _
    $region11: #{tpu_custom_call.1} parent=1 // pred_check_branch
      %38 = sbr.rel (0) target = $region13
    $region12: #{tpu_custom_call.1} parent=1 // pred_region
      %40 = dma.done [#allocation3], 256
    $region13: #{tpu_custom_call.1} parent=1 // pred_fallthru
      _
    // Predicated region
    $region14: #{tpu_custom_call.1} parent=1 // pred_check
      _
    $region15: #{tpu_custom_call.1} parent=1 // pred_check_branch
      %42 = sbr.rel (0) target = $region17
    $region16: #{tpu_custom_call.1} parent=1 // pred_region
      %44 = dma.done [#allocation5], 256
    $region17: #{tpu_custom_call.1} parent=1 // pred_fallthru
      _
    %p45 = scmp.eq.s32.totalorder 0, 0
    // Predicated region
    $region18: #{tpu_custom_call.1} parent=1 // pred_check
      %p46 = pneg %p45
    $region19: #{tpu_custom_call.1} parent=1 // pred_check_branch
      %48 = sbr.rel (%p46) target = $region21
    $region20: #{tpu_custom_call.1} parent=1 // pred_region
      %vm49 = vcmask 7168
      %50 = vst.msk [vmem:[%s2] sm:$0xff] %vm49, 0.0
      %51 = vst.msk [vmem:[%s2 + $0x8] sm:$0xff] %vm49, 0.0
      %52 = vst.msk [vmem:[%s3] sm:$0xff] %vm49, 0.0
      %53 = vst.msk [vmem:[%s3 + $0x8] sm:$0xff] %vm49, 0.0
    $region21: #{tpu_custom_call.1} parent=1 // pred_fallthru
      _
    %v54 = vld [vmem:[#allocation2] sm:$0xff]
    %v55 = vld [vmem:[#allocation2 + $0x8] sm:$0xff]
    %v56 = vround.ne.pseudo %v54
    %v57 = vround.ne.pseudo %v55
    %v58 = vld [vmem:[#allocation4] sm:$0xff]
    %v59 = vld [vmem:[#allocation4 + $0x8] sm:$0xff]
    %v60 = vround.ne.pseudo %v58
    %v61 = vround.ne.pseudo %v59
    %v62 = vmul.f32 %v56, %v60
    %v63 = vmul.f32 %v57, %v61
    %v64 = vadd.f32 %v56, %v60
    %v65 = vadd.f32 %v57, %v61
    %v66 = vld [vmem:[%s2] sm:$0xff]
    %v67 = vld [vmem:[%s2 + $0x8] sm:$0xff]
    %68 = vadd.xlane.f32.xlu0 %v62
    %v69 = vpop.xlane.xlu0 %68
    %70 = vadd.xlane.f32.xlu0 %v63
    %v71 = vpop.xlane.xlu0 %70
    %v72 = vadd.f32 %v66, %v69
    %v73 = vadd.f32 %v67, %v71
    %vm74 = vcmask 7168
    %75 = vst.msk [vmem:[%s2] sm:$0xff] %vm74, %v72
    %76 = vst.msk [vmem:[%s2 + $0x8] sm:$0xff] %vm74, %v73
    %v77 = vld [vmem:[%s3] sm:$0xff]
    %v78 = vld [vmem:[%s3 + $0x8] sm:$0xff]
    %79 = vadd.xlane.f32.xlu0 %v64
    %v80 = vpop.xlane.xlu0 %79
    %81 = vadd.xlane.f32.xlu0 %v65
    %v82 = vpop.xlane.xlu0 %81
    %v83 = vadd.f32 %v77, %v80
    %v84 = vadd.f32 %v78, %v82
    %85 = vst.msk [vmem:[%s3] sm:$0xff] %vm74, %v83
    %86 = vst.msk [vmem:[%s3 + $0x8] sm:$0xff] %vm74, %v84
    // Predicated region
    $region22: #{tpu_custom_call.1} parent=1 // pred_check
      _
    $region23: #{tpu_custom_call.1} parent=1 // pred_check_branch
      %88 = sbr.rel (0) target = $region25
    $region24: #{tpu_custom_call.1} parent=1 // pred_region
      _
    $region25: #{tpu_custom_call.1} parent=1 // pred_fallthru
      _
    // Predicated region
    $region26: #{tpu_custom_call.1} parent=1 // pred_check
      _
    $region27: #{tpu_custom_call.1} parent=1 // pred_check_branch
      %90 = sbr.rel (0) target = $region29
    $region28: #{tpu_custom_call.1} parent=1 // pred_region
      _
    $region29: #{tpu_custom_call.1} parent=1 // pred_fallthru
      _
    // Predicated region
    $region30: #{tpu_custom_call.1} parent=1 // pred_check
      _
    $region31: #{tpu_custom_call.1} parent=1 // pred_check_branch
      %92 = sbr.rel (0) target = $region33
    $region32: #{tpu_custom_call.1} parent=1 // pred_region
      _
    $region33: #{tpu_custom_call.1} parent=1 // pred_fallthru
      _
    // Predicated region
    $region34: #{tpu_custom_call.1} parent=1 // pred_check
      _
    $region35: #{tpu_custom_call.1} parent=1 // pred_check_branch
      %94 = sbr.rel (0) target = $region37
    $region36: #{tpu_custom_call.1} parent=1 // pred_region
      _
    $region37: #{tpu_custom_call.1} parent=1 // pred_fallthru
      _
    %95 = vsyncpa [#allocation3], 1
    %96 = vsyncpa [#allocation5], 1

</llo_original>
